<compile_context>
chip_gen: v5e
topology: v5e:2x2
jax: 0.10.0
libtpu: 0.0.40
codegen_flags: <defaults>
</compile_context>

<pallas_src>
import functools

import jax
import jax.numpy as jnp
from jax.experimental import pallas as pl
from jax.experimental.pallas import tpu as pltpu

_LANES = 128
_SUBLANES = 8
_CHUNK_ROWS = 512            # inner fold sub-chunk (multiple of 8/16/32)
_VMEM_LIMIT = 48 * 1024 * 1024


def _round_up(v: int, m: int) -> int:
    return ((v + m - 1) // m) * m


def _num_core_splits() -> int:
    """2-way megacore split only on v7x (2 TensorCores/chip); else 1."""
    try:
        kind = jax.devices()[0].device_kind.lower()
    except Exception:
        return 1
    return 2 if ("v7" in kind or "7x" in kind) else 1


def _hinge_kernel(x_ref, o_ref, *, real: bool, rows: int, row_tile: int,
                  chunk_rows: int, tiles_per_core: int, num_row_blocks: int,
                  need_mask: bool):
    c = pl.program_id(0)
    i = pl.program_id(1)
    tile_idx = c * tiles_per_core + i
    tile_row0 = tile_idx * row_tile
    nchunks = row_tile // chunk_rows

    # Output block (c, 0) is resident across the inner "arbitrary" axis:
    # zero-init once per split, accumulate every step (standard P3 pattern).
    @pl.when(i == 0)
    def _():
        o_ref[...] = jnp.zeros_like(o_ref)

    def fold(masked: bool):
        zero = jnp.zeros((_SUBLANES, _LANES), jnp.float32)

        def chunk_sum(r0, acc):
            # In-kernel cast: HBM traffic stays at the input's native width.
            x = x_ref[pl.ds(r0, chunk_rows), :].astype(jnp.float32)
            if real:
                val = x                              # y=+1 : loss = x
            else:
                val = jnp.maximum(0.0, 1.0 - x)      # y=-1 : loss = max(0,1-x)
            if masked:
                rid = (tile_row0 + r0
                       + jax.lax.broadcasted_iota(jnp.int32, (chunk_rows, 1), 0))
                val = jnp.where(rid < rows, val, 0.0)
            # Fold (chunk, 128) -> (8, 128): tile-aligned reshape + VPU adds.
            return acc + jnp.sum(val.reshape(-1, _SUBLANES, _LANES), axis=0)

        if nchunks == 1:
            acc = chunk_sum(0, zero)
        else:
            acc = jax.lax.fori_loop(
                0, nchunks,
                lambda s, a: chunk_sum(
                    pl.multiple_of(s * chunk_rows, chunk_rows), a),
                zero)
        o_ref[...] += acc

    if need_mask:
        # Only the last real tile (possibly partial) and the clamped duplicate
        # tile of the second split pay for the row mask.
        is_edge = tile_idx >= (num_row_blocks - 1)

        @pl.when(is_edge)
        def _():
            fold(True)

        @pl.when(jnp.logical_not(is_edge))
        def _():
            fold(False)
    else:
        fold(False)


def hinge_loss(x: jax.Array, real: bool = True) -> jax.Array:
    """Mean HingeEmbeddingLoss against all-(+1) or all-(-1) targets."""
    n = x.size
    flat = x.reshape(-1)                     # contiguous flatten: no HBM copy
    pad = (-n) % _LANES
    if pad:
        # Rare fallback (numel not a multiple of 128). Pad value is neutral
        # for the hinge sum in either branch (0 for real; 1 -> max(0,1-1)=0).
        flat = jnp.pad(flat, (0, pad), constant_values=(0.0 if real else 1.0))
    rows = flat.size // _LANES
    slab = flat.reshape(rows, _LANES)        # native dtype, lane-dense

    num_splits = _num_core_splits()
    max_row_tile = 16384 if num_splits == 2 else 8192   # 8 / 4 MiB f32 blocks

    itemsize = jnp.dtype(slab.dtype).itemsize
    align = max(_SUBLANES, 32 // max(1, itemsize))      # 8 f32, 16 bf16, 32 i8

    target = pl.cdiv(rows, num_splits)
    if target >= _CHUNK_ROWS:
        row_tile = min(max_row_tile, _round_up(target, _CHUNK_ROWS))
        chunk_rows = _CHUNK_ROWS
    else:
        row_tile = _round_up(target, align)
        chunk_rows = row_tile

    num_row_blocks = pl.cdiv(rows, row_tile)
    tiles_per_core = pl.cdiv(num_row_blocks, num_splits)
    need_mask = (num_splits * tiles_per_core * row_tile) != rows

    def x_index_map(c, i):
        # Clamp so the (possibly) extra tile of the second split re-reads a
        # valid block; its contribution is zeroed by the in-kernel row mask.
        return (jnp.minimum(c * tiles_per_core + i, num_row_blocks - 1), 0)

    kernel = functools.partial(
        _hinge_kernel, real=bool(real), rows=rows, row_tile=row_tile,
        chunk_rows=chunk_rows, tiles_per_core=tiles_per_core,
        num_row_blocks=num_row_blocks, need_mask=need_mask)

    partials = pl.pallas_call(
        kernel,
        out_shape=jax.ShapeDtypeStruct((num_splits * _SUBLANES, _LANES),
                                       jnp.float32),
        grid_spec=pltpu.PrefetchScalarGridSpec(
            num_scalar_prefetch=0,
            grid=(num_splits, tiles_per_core),
            in_specs=[pl.BlockSpec((row_tile, _LANES), x_index_map)],
            out_specs=pl.BlockSpec((_SUBLANES, _LANES), lambda c, i: (c, 0)),
        ),
        compiler_params=pltpu.CompilerParams(
            dimension_semantics=("parallel", "arbitrary"),
            vmem_limit_bytes=_VMEM_LIMIT),
    )(slab)

    # Single cheap cross-lane reduce of the (num_splits x 8, 128) partials.
    return jnp.sum(partials) / jnp.float32(n)


if __name__ == "__main__":
    key = jax.random.PRNGKey(0)
    x = jax.random.normal(key, (2, 4, 16, 16), dtype=jnp.float32)

    out_real = jax.block_until_ready(hinge_loss(x, real=True))
    out_fake = jax.block_until_ready(hinge_loss(x, real=False))

    ref_real = jnp.mean(x)
    ref_fake = jnp.mean(jnp.maximum(0.0, 1.0 - x))
    assert jnp.allclose(out_real, ref_real, atol=1e-5, rtol=1e-5)
    assert jnp.allclose(out_fake, ref_fake, atol=1e-5, rtol=1e-5)

    # Extra check: size not a multiple of 128 (pad fallback + edge mask path).
    y = jax.random.normal(jax.random.PRNGKey(1), (2, 3, 50), dtype=jnp.float32)
    out_odd = jax.block_until_ready(hinge_loss(y, real=False))
    ref_odd = jnp.mean(jnp.maximum(0.0, 1.0 - y))
    assert jnp.allclose(out_odd, ref_odd, atol=1e-5, rtol=1e-5)

    print("KERNEL_OK")
</pallas_src>

<mosaic_0001>
module attributes {stable_mosaic.version = 11 : i64} {
  func.func @_hinge_kernel(%arg0: i32, %arg1: i32, %arg2: memref<16x128xf32, #tpu.memory_space<vmem>>, %arg3: memref<8x128xf32, #tpu.memory_space<vmem>>) attributes {dimension_semantics = [#tpu.dimension_semantics<parallel>, #tpu.dimension_semantics<arbitrary>], iteration_bounds = array<i64: 1, 1>, scalar_prefetch = 0 : i64, scratch_operands = 0 : i64, tpu.core_type = #tpu.core_type<tc>, window_params = [{transform_indices = @transform_0, window_bounds = array<i64: 16, 128>}, {transform_indices = @transform_1, window_bounds = array<i64: 8, 128>}]} {
    %c0_i32 = arith.constant 0 : i32
    %0 = arith.cmpi eq, %arg1, %c0_i32 : i32
    %1 = arith.extui %0 : i1 to i32
    %c0_i32_0 = arith.constant 0 : i32
    %2 = arith.cmpi ne, %1, %c0_i32_0 : i32
    scf.if %2 {
      %cst_7 = arith.constant 0.000000e+00 : f32
      %11 = vector.broadcast %cst_7 : f32 to vector<8x128xf32>
      %c0_8 = arith.constant 0 : index
      %c0_9 = arith.constant 0 : index
      %12 = vector.load %arg3[%c0_8, %c0_9] : memref<8x128xf32, #tpu.memory_space<vmem>>, vector<8x128xf32>
      tpu.vector_store %arg3[%c0_8, %c0_9], %11 {strides = array<i32>} : memref<8x128xf32, #tpu.memory_space<vmem>>, vector<8x128xf32>,
    } else {
    }
    %cst = arith.constant 0.000000e+00 : f32
    %3 = vector.broadcast %cst : f32 to vector<8x128xf32>
    %c0 = arith.constant 0 : index
    %c0_1 = arith.constant 0 : index
    %4 = vector.load %arg2[%c0, %c0_1] : memref<16x128xf32, #tpu.memory_space<vmem>>, vector<16x128xf32>
    %5 = vector.shape_cast %4 : vector<16x128xf32> to vector<2x8x128xf32>
    %cst_2 = arith.constant dense<0.000000e+00> : vector<8x128xf32>
    %6 = vector.multi_reduction <add>, %5, %cst_2 [0] : vector<2x8x128xf32> to vector<8x128xf32>
    %7 = arith.addf %3, %6 : vector<8x128xf32>
    %c0_3 = arith.constant 0 : index
    %c0_4 = arith.constant 0 : index
    %8 = vector.load %arg3[%c0_3, %c0_4] : memref<8x128xf32, #tpu.memory_space<vmem>>, vector<8x128xf32>
    %9 = arith.addf %8, %7 : vector<8x128xf32>
    %c0_5 = arith.constant 0 : index
    %c0_6 = arith.constant 0 : index
    %10 = vector.load %arg3[%c0_5, %c0_6] : memref<8x128xf32, #tpu.memory_space<vmem>>, vector<8x128xf32>
    tpu.vector_store %arg3[%c0_5, %c0_6], %9 {strides = array<i32>} : memref<8x128xf32, #tpu.memory_space<vmem>>, vector<8x128xf32>,
    return
  }
  func.func @transform_0(%arg0: i32, %arg1: i32) -> (i32, i32) {
    %c1_i32 = arith.constant 1 : i32
    %0 = arith.muli %arg0, %c1_i32 : i32
    %1 = arith.addi %0, %arg1 : i32
    %c0_i32 = arith.constant 0 : i32
    %2 = arith.minsi %1, %c0_i32 : i32
    %c0_i32_0 = arith.constant 0 : i32
    %c0_i32_1 = arith.constant 0 : i32
    return %2, %c0_i32_0 : i32, i32
  }
  func.func @transform_1(%arg0: i32, %arg1: i32) -> (i32, i32) {
    %c0_i32 = arith.constant 0 : i32
    %c0_i32_0 = arith.constant 0 : i32
    return %arg0, %c0_i32 : i32, i32
  }
}

</mosaic_0001>

<llo_original>
// kernel: tpu_custom_call.1
$region0: #{tpu_custom_call.1}
  #allocation0 [shape = 'u32[]', space=smem, size = 0x4, offset = 0x4, fixed_abs, tag = 'smem constant byte address 0x4 - core index']
  #allocation1 [shape = 'u32[72,128]{1,0:T(1,128)}', space=vmem, size = 0x9000, scoped, tag = 'internal scratch']
  %s0 = inlined_call_operand.hbm [shape: f32[16,128], index: 0, kind: input, shape index: {}]
  %s1 = inlined_call_operand.hbm [shape: f32[8,128], index: 1, kind: output, shape index: {}]
  %s2 = sld [smem:[#allocation0]]
  $region22: #{tpu_custom_call.1} parent=0
    _
  %s4 = ssub.s32 1, %s2
  %s5 = scalar_select 0, %s4, %s2
  $region1: #{tpu_custom_call.1} parent=0
    #allocation2 [shape = 'u8[8192]{0}', space=vmem, size = 0x2000, scoped, tag = 'input window, operand 0, single buffered']
    #allocation3 [shape = 's32[1]{0}', space=sflag, size = 0x4, scoped, tag = 'scoped memory for tpu_custom_call.1']
    #allocation4 [shape = 's32[1]{0}', space=sflag, size = 0x4, scoped, tag = 'scoped memory for tpu_custom_call.1']
    #allocation5 [shape = 'u8[4096]{0}', space=vmem, size = 0x1000, scoped, tag = 'output window, operand 0, single buffered']
    %6 = vsyncpa [#allocation3], 0
    %7 = vsyncpa [#allocation4], 0
    // Predicated region
    $region2: #{tpu_custom_call.1} parent=1 // pred_check
      _
    $region3: #{tpu_custom_call.1} parent=1 // pred_check_branch
      %9 = sbr.rel (0) target = $region5
    $region4: #{tpu_custom_call.1} parent=1 // pred_region
      %s10 = sadd.s32 0, 0
      %p11 = scmp.lt.s32.totalorder %s10, 0
      %s12 = scalar_select %p11, %s10, 0
      %s13 = smul.u32 2, %s12
      %15 = vsyncadd [#allocation3], 0
      %s16 = smul.addr %s13, 8
      %s17 = scalar_lea.hbm %s0, %s16
      %s18 = sshll.u32 %s17, 4
      %s19 = int_to_ptr.hbm [resolvable:$true] %s18
      %s20 = sshll.u32 [#allocation2], 4
      %s21 = int_to_ptr.vmem [resolvable:$true] %s20
      %26 = dma.hbm_to_vmem [thread:$0]  %s19, 256, %s21, [#allocation3], 128, 128, 8
    $region5: #{tpu_custom_call.1} parent=1 // pred_fallthru
      _
    // Predicated region
    $region6: #{tpu_custom_call.1} parent=1 // pred_check
      _
    $region7: #{tpu_custom_call.1} parent=1 // pred_check_branch
      %28 = sbr.rel (0) target = $region9
    $region8: #{tpu_custom_call.1} parent=1 // pred_region
      %30 = dma.done [#allocation3], 256
    $region9: #{tpu_custom_call.1} parent=1 // pred_fallthru
      _
    %s31 = sadd.s32 0, 0
    %p32 = scmp.lt.s32.totalorder %s31, 0
    %s33 = scalar_select %p32, %s31, 0
    %s34 = smul.u32 2, %s33
    %p35 = scmp.eq.s32.totalorder 0, 0
    // Predicated region
    $region10: #{tpu_custom_call.1} parent=1 // pred_check
      %p36 = pneg %p35
    $region11: #{tpu_custom_call.1} parent=1 // pred_check_branch
      %38 = sbr.rel (%p36) target = $region13
    $region12: #{tpu_custom_call.1} parent=1 // pred_region
      %39 = vst [vmem:[#allocation5] sm:$0xff] 0.0
    $region13: #{tpu_custom_call.1} parent=1 // pred_fallthru
      _
    %v40 = vld [vmem:[#allocation2] sm:$0xff]
    %v41 = vld [vmem:[#allocation2 + $0x8] sm:$0xff]
    %v42 = vadd.f32 %v40, %v41
    %v43 = vadd.f32 %v42, 0.0
    %v44 = vld [vmem:[#allocation5] sm:$0xff]
    %v45 = vadd.f32 %v44, %v43
    %46 = vst [vmem:[#allocation5] sm:$0xff] %v45
    // Predicated region
    $region14: #{tpu_custom_call.1} parent=1 // pred_check
      _
    $region15: #{tpu_custom_call.1} parent=1 // pred_check_branch
      %48 = sbr.rel (0) target = $region17
    $region16: #{tpu_custom_call.1} parent=1 // pred_region
      %50 = vsyncadd [#allocation4], 0
      %s52 = sshll.u32 [#allocation5], 4
      %s53 = int_to_ptr.vmem [resolvable:$true] %s52
      %s54 = sshll.u32 %s1, 4
      %s55 = int_to_ptr.hbm [resolvable:$true] %s54
      %57 = dma.vmem_to_hbm [thread:$0]  %s53, 128, %s55, [#allocation4]
    $region17: #{tpu_custom_call.1} parent=1 // pred_fallthru
      _
    // Predicated region
    $region18: #{tpu_custom_call.1} parent=1 // pred_check
      _
    $region19: #{tpu_custom_call.1} parent=1 // pred_check_branch
      %59 = sbr.rel (0) target = $region21
    $region20: #{tpu_custom_call.1} parent=1 // pred_region
      %61 = dma.done [#allocation4], 128
    $region21: #{tpu_custom_call.1} parent=1 // pred_fallthru
      _
    %62 = vsyncpa [#allocation3], 1
    %63 = vsyncpa [#allocation4], 1

</llo_original>
